<compile_context>
chip_gen: v7x
topology: tpu7x:2x2x1
jax: 0.10.0
libtpu: 0.0.40
codegen_flags: <defaults>
</compile_context>

<pallas_src>
import math
import collections.abc
from itertools import repeat

import jax
import jax.numpy as jnp
from jax import lax
from jax.experimental import pallas as pl
from jax.experimental.pallas import tpu as pltpu


def _to_tuple(n):
    def parse(x):
        if isinstance(x, collections.abc.Iterable):
            return tuple(x)
        return tuple(repeat(x, n))
    return parse


def _flip_small(x, axis):
    """Reverse a *small* border slab along `axis`.

    Border widths are tiny (<= (k-1)*d/2 + 1), so reversed-order unit slices +
    one concat are cheap and use only ops with guaranteed Mosaic lowering.
    # TODO(synk): switch to lax.rev (single XLU permute) once its Pallas TPU
    # lowering is confirmed on all target generations; borders are tiny so the
    # win is minor.
    """
    n = x.shape[axis]
    if n == 1:
        return x
    parts = [lax.slice_in_dim(x, i, i + 1, axis=axis) for i in range(n - 1, -1, -1)]
    return jnp.concatenate(parts, axis=axis)


def _border_pieces(x, pad_before, pad_after, axis, mode):
    """Return (before, after) border slabs along `axis` (each may be None).

    symmetric -> contiguous slice, reversed
    replicate -> single broadcast of the edge slice
    circular  -> contiguous wrap-around slice
    """
    n = x.shape[axis]
    before = after = None
    if mode == "symmetric":
        if pad_before:
            before = _flip_small(lax.slice_in_dim(x, 0, pad_before, axis=axis), axis)
        if pad_after:
            after = _flip_small(lax.slice_in_dim(x, n - pad_after, n, axis=axis), axis)
    elif mode == "replicate":
        if pad_before:
            shp = list(x.shape); shp[axis] = pad_before
            before = jnp.broadcast_to(lax.slice_in_dim(x, 0, 1, axis=axis), tuple(shp))
        if pad_after:
            shp = list(x.shape); shp[axis] = pad_after
            after = jnp.broadcast_to(lax.slice_in_dim(x, n - 1, n, axis=axis), tuple(shp))
    elif mode == "circular":
        if pad_before:
            before = lax.slice_in_dim(x, n - pad_before, n, axis=axis)
        if pad_after:
            after = lax.slice_in_dim(x, 0, pad_after, axis=axis)
    else:
        raise ValueError(f"unsupported mode: {mode}")
    return before, after


def _make_pad_kernel(H, W, pad_t, pad_b, pad_l, pad_r, mode):
    """Whole-plane padding kernel: (tbc, H, W) -> (tbc, H_out, W_out)."""
    mode_key = "constant" if mode == "same" else mode
    H_out = H + pad_t + pad_b
    W_out = W + pad_l + pad_r
    any_pad = bool(pad_t or pad_b or pad_l or pad_r)

    def kernel(x_ref, o_ref):
        x = x_ref[...]                       # (tbc, H, W) block of planes

        if not any_pad:
            o_ref[...] = x
            return

        # Interior stored exactly once (no full-block zero fill + overwrite).
        o_ref[:, pad_t:pad_t + H, pad_l:pad_l + W] = x

        if mode_key == "constant":
            def zeros(r, c):
                return jnp.zeros((x.shape[0], r, c), x.dtype)
            if pad_l:
                o_ref[:, pad_t:pad_t + H, 0:pad_l] = zeros(H, pad_l)
            if pad_r:
                o_ref[:, pad_t:pad_t + H, pad_l + W:W_out] = zeros(H, pad_r)
            if pad_t:
                o_ref[:, 0:pad_t, :] = zeros(pad_t, W_out)
            if pad_b:
                o_ref[:, pad_t + H:H_out, :] = zeros(pad_b, W_out)
            return

        # Left / right interior column bands.
        left, right = _border_pieces(x, pad_l, pad_r, axis=2, mode=mode_key)
        if left is not None:
            o_ref[:, pad_t:pad_t + H, 0:pad_l] = left
        if right is not None:
            o_ref[:, pad_t:pad_t + H, pad_l + W:W_out] = right

        # Full-width (lane-dense) top / bottom row bands, corners included.
        def full_band(rows):                 # rows: (tbc, pad, W)
            lb, rb = _border_pieces(rows, pad_l, pad_r, axis=2, mode=mode_key)
            pieces = [p for p in (lb, rows, rb) if p is not None]
            if len(pieces) == 1:
                return pieces[0]
            return jnp.concatenate(pieces, axis=2)

        if pad_t:
            top_rows, _ = _border_pieces(x, pad_t, 0, axis=1, mode=mode_key)
            o_ref[:, 0:pad_t, :] = full_band(top_rows)
        if pad_b:
            _, bot_rows = _border_pieces(x, 0, pad_b, axis=1, mode=mode_key)
            o_ref[:, pad_t + H:H_out, :] = full_band(bot_rows)

    return kernel


def _make_colpad_kernel(W, pad_l, pad_r, mode):
    """Column-only padding kernel for the row-banded path.

    Input block (1, R, W) whose rows already include the row padding; output
    block (1, R, W_out).
    """
    mode_key = "constant" if mode == "same" else mode
    W_out = W + pad_l + pad_r

    def kernel(x_ref, o_ref):
        x = x_ref[...]
        o_ref[:, :, pad_l:pad_l + W] = x
        if mode_key == "constant":
            def zeros(c):
                return jnp.zeros((x.shape[0], x.shape[1], c), x.dtype)
            if pad_l:
                o_ref[:, :, 0:pad_l] = zeros(pad_l)
            if pad_r:
                o_ref[:, :, pad_l + W:W_out] = zeros(pad_r)
            return
        left, right = _border_pieces(x, pad_l, pad_r, axis=2, mode=mode_key)
        if left is not None:
            o_ref[:, :, 0:pad_l] = left
        if right is not None:
            o_ref[:, :, pad_l + W:W_out] = right

    return kernel


def _vmem_capacity_bytes():
    """Physical per-core VMEM; conservative default if the query fails."""
    try:
        info = pltpu.get_tpu_info()
        cap = getattr(info, "vmem_capacity_bytes", None)
        if cap:
            return int(cap)
    except Exception:
        pass
    return 64 * 1024 * 1024   # v7x per-TensorCore VMEM (smallest generation)


def _default_block_budget():
    # ~3/8 of physical VMEM for the double-buffered (in + out) working set:
    # ~24 MiB on v7x (64 MiB/TC), ~48 MiB on v5e / v6e (128 MiB VMEM).
    return max(8 << 20, (_vmem_capacity_bytes() * 3) // 8)


class ExactPadding2dPallas:
    """Pallas port of `_ExactPadding2d` (TensorFlow-style 'SAME' exact padding)."""

    def __init__(self, kernel, stride=1, dilation=1, mode="same",
                 block_budget_bytes=None, min_grid_steps=8):
        self.kernel = _to_tuple(2)(kernel)
        self.stride = _to_tuple(2)(stride)
        self.dilation = _to_tuple(2)(dilation)
        if mode not in ("same", "symmetric", "replicate", "circular"):
            raise ValueError(f"unsupported mode: {mode}")
        self.mode = mode
        self.min_grid_steps = max(1, int(min_grid_steps))
        self._vmem_cap = _vmem_capacity_bytes()
        if block_budget_bytes is None:
            block_budget_bytes = _default_block_budget()
        self.block_budget_bytes = int(block_budget_bytes)

    # ------------------------------------------------------------------ utils
    def _vmem_limit(self, working_set_bytes):
        # Leave headroom under the per-core physical VMEM (<= 48 MiB on v7x,
        # <= 96 MiB on v5e/v6e); never below the 32 MiB scoped default.
        hi = (self._vmem_cap * 3) // 4
        return int(min(hi, max(32 * 1024 * 1024, working_set_bytes + (4 << 20))))

    def _pads(self, H, W):
        k, s, d = self.kernel, self.stride, self.dilation
        h2 = math.ceil(H / s[0])
        w2 = math.ceil(W / s[1])
        pad_row = (h2 - 1) * s[0] + (k[0] - 1) * d[0] + 1 - H
        pad_col = (w2 - 1) * s[1] + (k[1] - 1) * d[1] + 1 - W
        pad_l = pad_col // 2
        pad_r = pad_col - pad_l
        pad_t = pad_row // 2
        pad_b = pad_row - pad_t
        return pad_t, pad_b, pad_l, pad_r

    # -------------------------------------------------------------- main path
    def __call__(self, x):
        assert x.ndim == 4, f"Only support 4D tensor input, but got {x.shape}"
        B, C, H, W = x.shape
        pad_t, pad_b, pad_l, pad_r = self._pads(H, W)
        # TODO(synk): negative exact-padding (cropping, for some stride/kernel
        # combos) is not handled in the kernel path.
        assert min(pad_l, pad_r, pad_t, pad_b) >= 0, "negative padding not supported"
        if self.mode in ("symmetric", "circular"):
            # TODO(synk): multi-wrap padding (pad > plane size) not supported.
            assert max(pad_t, pad_b) <= H and max(pad_l, pad_r) <= W, \
                "padding larger than the plane is not supported"

        H_out = H + pad_t + pad_b
        W_out = W + pad_l + pad_r
        BC = B * C
        x_flat = x.reshape(BC, H, W)

        dtype_bytes = jnp.dtype(x.dtype).itemsize
        per_plane = dtype_bytes * (H * W + H_out * W_out)
        budget = self.block_budget_bytes

        if 2 * per_plane > budget:
            # A single plane (double-buffered in+out) doesn't fit -> row bands.
            out = self._pad_row_banded(x_flat, (pad_t, pad_b, pad_l, pad_r),
                                       dtype_bytes)
            return out.reshape(B, C, H_out, W_out)

        # --- block of whole planes per grid step ------------------------------
        tbc_max = max(1, budget // (2 * per_plane))
        # Guarantee >= min_grid_steps grid steps whenever BC allows it so read
        # and write DMAs overlap (and both v7x TCs get work).
        pipe_cap = max(1, BC // min(self.min_grid_steps, BC))
        tbc = max(1, min(tbc_max, pipe_cap, BC))
        grid = pl.cdiv(BC, tbc)          # ragged last block is fine

        kern = _make_pad_kernel(H, W, pad_t, pad_b, pad_l, pad_r, self.mode)
        cost = pl.CostEstimate(
            flops=0, transcendentals=0,
            bytes_accessed=dtype_bytes * BC * (H * W + H_out * W_out))
        vmem_limit = self._vmem_limit(2 * tbc * per_plane)

        out = pl.pallas_call(
            kern,
            out_shape=jax.ShapeDtypeStruct((BC, H_out, W_out), x.dtype),
            grid=(grid,),
            in_specs=[pl.BlockSpec((tbc, H, W), lambda i: (i, 0, 0))],
            out_specs=pl.BlockSpec((tbc, H_out, W_out), lambda i: (i, 0, 0)),
            compiler_params=pltpu.CompilerParams(
                dimension_semantics=("parallel",),
                vmem_limit_bytes=vmem_limit),
            cost_estimate=cost,
        )(x_flat)

        return out.reshape(B, C, H_out, W_out)

    # --------------------------------------------------------- row-banded path
    def _pad_row_banded(self, x_flat, pads, dtype_bytes):
        """Large-plane / BC=1 path: XLA row pre-pad + Pallas column pad per band.

        # TODO(synk): a fully fused two-axis (rows + columns) Pallas pipeline
        # needs element-offset output blocks; the (tiny) row pads are applied
        # by XLA here, costing one extra HBM round trip of the plane.
        """
        pad_t, pad_b, pad_l, pad_r = pads
        BC, H, W = x_flat.shape
        H_out = H + pad_t + pad_b
        W_out = W + pad_l + pad_r

        np_mode = {"same": "constant", "symmetric": "symmetric",
                   "replicate": "edge", "circular": "wrap"}[self.mode]
        if pad_t or pad_b:
            if np_mode == "constant":
                xr = jnp.pad(x_flat, ((0, 0), (pad_t, pad_b), (0, 0)),
                             mode="constant", constant_values=0)
            else:
                xr = jnp.pad(x_flat, ((0, 0), (pad_t, pad_b), (0, 0)), mode=np_mode)
        else:
            xr = x_flat

        per_row = dtype_bytes * (W + W_out)
        budget = self.block_budget_bytes
        r_max = max(8, ((budget // (2 * per_row)) // 8) * 8)
        # Aim for >= min_grid_steps row bands per plane when H_out allows it.
        r_target = max(8, ((-(-H_out // self.min_grid_steps) + 7) // 8) * 8)
        R = min(r_max, r_target)
        if R >= H_out:
            R = H_out
        nbands = pl.cdiv(H_out, R)       # ragged last band is fine

        kern = _make_colpad_kernel(W, pad_l, pad_r, self.mode)
        cost = pl.CostEstimate(
            flops=0, transcendentals=0,
            bytes_accessed=dtype_bytes * BC * H_out * (W + W_out))
        vmem_limit = self._vmem_limit(2 * R * per_row)

        return pl.pallas_call(
            kern,
            out_shape=jax.ShapeDtypeStruct((BC, H_out, W_out), x_flat.dtype),
            grid=(BC, nbands),
            in_specs=[pl.BlockSpec((1, R, W), lambda i, j: (i, j, 0))],
            out_specs=pl.BlockSpec((1, R, W_out), lambda i, j: (i, j, 0)),
            compiler_params=pltpu.CompilerParams(
                dimension_semantics=("parallel", "parallel"),
                vmem_limit_bytes=vmem_limit),
            cost_estimate=cost,
        )(xr)


def _reference(x, kernel, stride, dilation, mode):
    """Pure-JAX reference reproducing the torch semantics via jnp.pad."""
    B, C, H, W = x.shape
    k = _to_tuple(2)(kernel); s = _to_tuple(2)(stride); d = _to_tuple(2)(dilation)
    h2 = math.ceil(H / s[0]); w2 = math.ceil(W / s[1])
    pad_row = (h2 - 1) * s[0] + (k[0] - 1) * d[0] + 1 - H
    pad_col = (w2 - 1) * s[1] + (k[1] - 1) * d[1] + 1 - W
    pad_l, pad_r = pad_col // 2, pad_col - pad_col // 2
    pad_t, pad_b = pad_row // 2, pad_row - pad_row // 2
    np_mode = {"same": "constant", "symmetric": "symmetric",
               "replicate": "edge", "circular": "wrap"}[mode]
    pads = ((0, 0), (0, 0), (pad_t, pad_b), (pad_l, pad_r))
    if np_mode == "constant":
        return jnp.pad(x, pads, mode="constant", constant_values=0)
    return jnp.pad(x, pads, mode=np_mode)


if __name__ == "__main__":
    key = jax.random.PRNGKey(0)
    x = jax.random.normal(key, (2, 4, 16, 16), dtype=jnp.float32)

    # Main path, all four modes.
    for mode in ("same", "symmetric", "replicate", "circular"):
        module = ExactPadding2dPallas(kernel=7, stride=1, dilation=1, mode=mode)
        out = jax.block_until_ready(module(x))
        ref = _reference(x, 7, 1, 1, mode)
        assert out.shape == ref.shape, (mode, out.shape, ref.shape)
        assert jnp.array_equal(out, ref), f"mismatch in mode={mode}"

    # stride > 1 (different pad split), non-divisible BC, ragged last BC block
    # (min_grid_steps=2 -> tbc=7 over BC=15 -> blocks of 7,7,1).
    x2 = jax.random.normal(jax.random.PRNGKey(0), (3, 5, 24, 20), dtype=jnp.float32)
    for mode in ("same", "replicate", "circular", "symmetric"):
        module = ExactPadding2dPallas(kernel=3, stride=2, dilation=1, mode=mode,
                                      min_grid_steps=2)
        out = jax.block_until_ready(module(x2))
        ref = _reference(x2, 3, 2, 1, mode)
        assert out.shape == ref.shape, (mode, out.shape, ref.shape)
        assert jnp.array_equal(out, ref), f"mismatch in mode={mode} (ragged BC)"

    # Row-banded fallback path (forced with a tiny block budget): the path used
    # when a single plane does not fit VMEM (e.g. BC=1 large grayscale images).
    for mode in ("same", "replicate", "circular", "symmetric"):
        module = ExactPadding2dPallas(kernel=7, stride=1, dilation=1, mode=mode,
                                      block_budget_bytes=4096, min_grid_steps=2)
        out = jax.block_until_ready(module(x2))
        ref = _reference(x2, 7, 1, 1, mode)
        assert out.shape == ref.shape, (mode, out.shape, ref.shape)
        assert jnp.array_equal(out, ref), f"mismatch in mode={mode} (row-banded)"

    # pad == plane-size edge case for symmetric / circular (review concern).
    x3 = jax.random.normal(jax.random.PRNGKey(0), (1, 2, 4, 4), dtype=jnp.float32)
    for mode in ("symmetric", "circular"):
        module = ExactPadding2dPallas(kernel=9, stride=1, dilation=1, mode=mode)
        out = jax.block_until_ready(module(x3))
        ref = _reference(x3, 9, 1, 1, mode)
        assert out.shape == ref.shape, (mode, out.shape, ref.shape)
        assert jnp.array_equal(out, ref), f"mismatch in mode={mode} (pad == plane)"

    print("KERNEL_OK")
</pallas_src>

<mosaic_0001>
module attributes {stable_mosaic.version = 11 : i64} {
  func.func @kernel(%arg0: i32, %arg1: memref<1x16x16xf32, #tpu.memory_space<vmem>>, %arg2: memref<1x22x22xf32, #tpu.memory_space<vmem>>) attributes {dimension_semantics = [#tpu.dimension_semantics<parallel>], iteration_bounds = array<i64: 8>, scalar_prefetch = 0 : i64, scratch_operands = 0 : i64, tpu.core_type = #tpu.core_type<tc>, window_params = [{transform_indices = @transform_0, window_bounds = array<i64: 1, 16, 16>}, {transform_indices = @transform_1, window_bounds = array<i64: 1, 22, 22>}]} {
    %c0 = arith.constant 0 : index
    %c0_0 = arith.constant 0 : index
    %c0_1 = arith.constant 0 : index
    %0 = vector.load %arg1[%c0, %c0_0, %c0_1] : memref<1x16x16xf32, #tpu.memory_space<vmem>>, vector<1x16x16xf32>
    %c0_2 = arith.constant 0 : index
    %c3 = arith.constant 3 : index
    %c3_3 = arith.constant 3 : index
    %1 = vector.load %arg2[%c0_2, %c3, %c3_3] : memref<1x22x22xf32, #tpu.memory_space<vmem>>, vector<1x16x16xf32>
    tpu.vector_store %arg2[%c0_2, %c3, %c3_3], %0 {strides = array<i32>} : memref<1x22x22xf32, #tpu.memory_space<vmem>>, vector<1x16x16xf32>,
    %cst = arith.constant 0.000000e+00 : f32
    %2 = vector.broadcast %cst : f32 to vector<1x16x3xf32>
    %c0_4 = arith.constant 0 : index
    %c3_5 = arith.constant 3 : index
    %c0_6 = arith.constant 0 : index
    %3 = vector.load %arg2[%c0_4, %c3_5, %c0_6] : memref<1x22x22xf32, #tpu.memory_space<vmem>>, vector<1x16x3xf32>
    tpu.vector_store %arg2[%c0_4, %c3_5, %c0_6], %2 {strides = array<i32>} : memref<1x22x22xf32, #tpu.memory_space<vmem>>, vector<1x16x3xf32>,
    %cst_7 = arith.constant 0.000000e+00 : f32
    %4 = vector.broadcast %cst_7 : f32 to vector<1x16x3xf32>
    %c0_8 = arith.constant 0 : index
    %c3_9 = arith.constant 3 : index
    %c19 = arith.constant 19 : index
    %5 = vector.load %arg2[%c0_8, %c3_9, %c19] : memref<1x22x22xf32, #tpu.memory_space<vmem>>, vector<1x16x3xf32>
    tpu.vector_store %arg2[%c0_8, %c3_9, %c19], %4 {strides = array<i32>} : memref<1x22x22xf32, #tpu.memory_space<vmem>>, vector<1x16x3xf32>,
    %cst_10 = arith.constant 0.000000e+00 : f32
    %6 = vector.broadcast %cst_10 : f32 to vector<1x3x22xf32>
    %c0_11 = arith.constant 0 : index
    %c0_12 = arith.constant 0 : index
    %c0_13 = arith.constant 0 : index
    %7 = vector.load %arg2[%c0_11, %c0_12, %c0_13] : memref<1x22x22xf32, #tpu.memory_space<vmem>>, vector<1x3x22xf32>
    tpu.vector_store %arg2[%c0_11, %c0_12, %c0_13], %6 {strides = array<i32>} : memref<1x22x22xf32, #tpu.memory_space<vmem>>, vector<1x3x22xf32>,
    %cst_14 = arith.constant 0.000000e+00 : f32
    %8 = vector.broadcast %cst_14 : f32 to vector<1x3x22xf32>
    %c0_15 = arith.constant 0 : index
    %c19_16 = arith.constant 19 : index
    %c0_17 = arith.constant 0 : index
    %9 = vector.load %arg2[%c0_15, %c19_16, %c0_17] : memref<1x22x22xf32, #tpu.memory_space<vmem>>, vector<1x3x22xf32>
    tpu.vector_store %arg2[%c0_15, %c19_16, %c0_17], %8 {strides = array<i32>} : memref<1x22x22xf32, #tpu.memory_space<vmem>>, vector<1x3x22xf32>,
    return
  }
  func.func @transform_0(%arg0: i32) -> (i32, i32, i32) {
    %c0_i32 = arith.constant 0 : i32
    %c0_i32_0 = arith.constant 0 : i32
    %c0_i32_1 = arith.constant 0 : i32
    return %arg0, %c0_i32, %c0_i32_0 : i32, i32, i32
  }
  func.func @transform_1(%arg0: i32) -> (i32, i32, i32) {
    %c0_i32 = arith.constant 0 : i32
    %c0_i32_0 = arith.constant 0 : i32
    %c0_i32_1 = arith.constant 0 : i32
    return %arg0, %c0_i32, %c0_i32_0 : i32, i32, i32
  }
}

</mosaic_0001>

<llo_original>
// kernel: tpu_custom_call.1
$region0: #{tpu_custom_call.1}
  #allocation0 [shape = 'u32[]', space=smem, size = 0x4, offset = 0x4, fixed_abs, tag = 'smem constant byte address 0x4 - core index']
  #allocation1 [shape = 'u32[144,128]{1,0:T(1,128)}', space=vmem, size = 0x12000, scoped, tag = 'internal scratch']
  %s0 = inlined_call_operand.hbm [shape: f32[8,16,16], index: 0, kind: input, shape index: {}]
  %s1 = inlined_call_operand.vmem [shape: f32[8,22,22], index: 1, kind: output, shape index: {}]
  %s2 = sld [smem:[#allocation0]]
  $region41: #{tpu_custom_call.1} parent=0
    _
  %s4 = ssub.s32 1, %s2
  %s5 = scalar_select 0, %s4, %s2
  $region1: #{tpu_custom_call.1} parent=0
    #allocation2 [shape = 'u8[16384]{0}', space=vmem, size = 0x4000, scoped, tag = 'input window, operand 0']
    #allocation3 [shape = 's32[2]{0}', space=sflag, size = 0x8, scoped, tag = 'scoped memory for tpu_custom_call.1']
    %6 = vsyncpa [#allocation3], 0
    %s7 = scalar_lea.sflag [#allocation3], 1
    %8 = vsyncpa %s7, 0
    loop: start=0, step=1, limit=10
    $region2: #{tpu_custom_call.1} parent=1 // loop_pre_header
      _
    $region3: #{tpu_custom_call.1} parent=1 // loop_header
      %s10 = sphi 0, %s14
      %p11 = scmp.ge.s32.totalorder %s10, 10
      %s20 = sphi 0, %s22
      %s23 = sphi 0, %s20
      %s24 = sphi 0, %s23
      %s40 = sphi 0, %s24
      %s46 = sphi 0, %s48
      %s49 = sphi 0, %s46
      %s50 = sphi 0, %s49
      %s66 = sphi 0, %s50
    $region4: #{tpu_custom_call.1} parent=1 // loop_header_branch
      %13 = sbr.rel (%p11) target = $region8
    $region5: #{tpu_custom_call.1} parent=1 // loop_body
      %s15 = ssub.s32 %s10, 1
      %s16 = ssub.s32 %s10, 2
      %s17 = sadd.s32 %s10, 1
      %s18 = ssub.s32 %s10, %s17
      %p19 = scmp.eq.s32.totalorder %s18, 0
      %s21 = sadd.s32 %s20, 1
      %s22 = scalar_select %p19, %s20, %s21
      %p25 = pneg %p19
      %p26 = scmp.eq.s32.totalorder %s10, 7
      %p27 = por %p25, %p26
      %p28 = scmp.ne.s32.totalorder %s20, %s23
      %p29 = scmp.eq.s32.totalorder %s10, 0
      %p30 = por %p28, %p29
      %p31 = scmp.ne.s32.totalorder %s20, %s23
      %p32 = scmp.eq.s32.totalorder %s15, 7
      %p33 = por %p31, %p32
      %p34 = scmp.ne.s32.totalorder %s23, %s24
      %p35 = scmp.eq.s32.totalorder %s15, 0
      %p36 = por %p34, %p35
      %p37 = scmp.ne.s32.totalorder %s23, %s24
      %p38 = scmp.eq.s32.totalorder %s16, 7
      %p39 = por %p37, %p38
      %p41 = scmp.ne.s32.totalorder %s24, %s40
      %p42 = scmp.eq.s32.totalorder %s16, 0
      %p43 = por %p41, %p42
      %s44 = ssub.s32 %s10, %s17
      %p45 = scmp.eq.s32.totalorder %s44, 0
      %s47 = sadd.s32 %s46, 1
      %s48 = scalar_select %p45, %s46, %s47
      %p51 = pneg %p45
      %p52 = scmp.eq.s32.totalorder %s10, 7
      %p53 = por %p51, %p52
      %p54 = scmp.ne.s32.totalorder %s46, %s49
      %p55 = scmp.eq.s32.totalorder %s10, 0
      %p56 = por %p54, %p55
      %p57 = scmp.ne.s32.totalorder %s46, %s49
      %p58 = scmp.eq.s32.totalorder %s15, 7
      %p59 = por %p57, %p58
      %p60 = scmp.ne.s32.totalorder %s49, %s50
      %p61 = scmp.eq.s32.totalorder %s15, 0
      %p62 = por %p60, %p61
      %p63 = scmp.ne.s32.totalorder %s49, %s50
      %p64 = scmp.eq.s32.totalorder %s16, 7
      %p65 = por %p63, %p64
      %p67 = scmp.ne.s32.totalorder %s50, %s66
      %p68 = scmp.eq.s32.totalorder %s16, 0
      %p69 = por %p67, %p68
      %p70 = scmp.le.s32.totalorder 1, %s10
      %p71 = scmp.lt.s32.totalorder %s10, 9
      %p72 = pnand %p70, %p71
      %p73 = pneg %p72
      // Predicated region
      $region9: #{tpu_custom_call.1} parent=5 // pred_check
        _
      $region10: #{tpu_custom_call.1} parent=5 // pred_check_branch
        %75 = sbr.rel (%p72) target = $region12
      $region11: #{tpu_custom_call.1} parent=5 // pred_region
        %s76 = ssub.s32 %s10, 1
      $region12: #{tpu_custom_call.1} parent=5 // pred_fallthru
        _
      %p77 = scmp.lt.s32.totalorder %s10, 8
      // Predicated region
      $region13: #{tpu_custom_call.1} parent=5 // pred_check
        %p78 = pneg %p77
      $region14: #{tpu_custom_call.1} parent=5 // pred_check_branch
        %80 = sbr.rel (%p78) target = $region16
      $region15: #{tpu_custom_call.1} parent=5 // pred_region
        // Predicated region
        $region17: #{tpu_custom_call.1} parent=15 // pred_check
          %p81 = pneg %p30
        $region18: #{tpu_custom_call.1} parent=15 // pred_check_branch
          %83 = sbr.rel (%p81) target = $region20
        $region19: #{tpu_custom_call.1} parent=15 // pred_region
          %s84 = sand.u32 %s20, 1
          %s85 = scalar_lea.sflag [#allocation3], %s84
          %s86 = sand.u32 %s20, 1
          %s87 = smul.addr %s86, 16
          %s88 = scalar_lea.vmem [#allocation2], %s87
          %s90 = ssub.s32 256, 256
          %91 = vsyncadd %s85, %s90
          %s92 = smul.addr %s10, 2
          %s93 = smul.addr %s92, 128
          %s94 = scalar_lea.hbm %s0, %s93
          %s95 = sshll.u32 %s88, 4
          %s96 = int_to_ptr.vmem [resolvable:$true] %s95
          %101 = dma.hbm_to_vmem [thread:$0]  %s94, 256, %s96, %s85, 128, 128, 8
        $region20: #{tpu_custom_call.1} parent=15 // pred_fallthru
          _
      $region16: #{tpu_custom_call.1} parent=5 // pred_fallthru
        _
      %p102 = scmp.le.s32.totalorder 1, %s10
      %p103 = scmp.lt.s32.totalorder %s10, 9
      %p104 = pnand %p102, %p103
      %p105 = pneg %p104
      // Predicated region
      $region21: #{tpu_custom_call.1} parent=5 // pred_check
        _
      $region22: #{tpu_custom_call.1} parent=5 // pred_check_branch
        %107 = sbr.rel (%p104) target = $region24
      $region23: #{tpu_custom_call.1} parent=5 // pred_region
        %s108 = ssub.s32 %s10, 1
        %s109 = sand.u32 %s23, 1
        %s110 = scalar_lea.sflag [#allocation3], %s109
        %s111 = sand.u32 %s23, 1
        %s112 = smul.addr %s111, 16
        %s113 = scalar_lea.vmem [#allocation2], %s112
        // Predicated region
        $region25: #{tpu_custom_call.1} parent=23 // pred_check
          %p114 = pneg %p36
        $region26: #{tpu_custom_call.1} parent=23 // pred_check_branch
          %116 = sbr.rel (%p114) target = $region28
        $region27: #{tpu_custom_call.1} parent=23 // pred_region
          %117 = dma.done %s110, 256
        $region28: #{tpu_custom_call.1} parent=23 // pred_fallthru
          _
        %s118 = sand.u32 %s23, 1
        %s119 = scalar_lea.sflag [#allocation3], %s118
        %s120 = sand.u32 %s23, 1
        %s121 = smul.addr %s120, 16
        %s122 = scalar_lea.vmem [#allocation2], %s121
        %p123 = pneg %p36
        %p124 = pneg %p33
        %p125 = pneg %p62
        %p126 = pneg %p59
        %p127 = scmp.lt.s32.totalorder %s15, 7
        %s128 = scalar_select %p127, %s15, 7
        %s129 = smul.addr %s128, 3
        %s130 = smul.addr %s129, 8
        %s131 = scalar_lea.vmem %s1, %s130
        %p132 = scmp.lt.s32.totalorder %s15, 7
        %s133 = scalar_select %p132, %s15, 7
        %s134 = smul.addr %s133, 3
        %s135 = smul.addr %s134, 8
        %s136 = scalar_lea.vmem %s1, %s135
        %v137 = vld [vmem:[%s113] sm:$0xff]
        %v138 = vld [vmem:[%s113 + $0x8] sm:$0xff]
        %141 = vrot.lane.b32.xlu0 %v137, 3
        %v142 = vpop.permute.xlu0 %141
        %143 = vrot.lane.b32.xlu0 %v138, 3
        %v144 = vpop.permute.xlu0 %143
        %vm147 = vcmask 154648
        %148 = vst.msk [vmem:[%s136 + $0x3] sm:$0xff] %vm147, %v142
        %149 = vst.msk [vmem:[%s136 + $0xb] sm:$0xff] %vm147, %v144
        %vm150 = vcmask 23552
        %151 = vst.msk [vmem:[%s136 + $0x3] sm:$0xff] %vm150, 0.0
        %152 = vst.msk [vmem:[%s136 + $0xb] sm:$0xff] %vm150, 0.0
        %vm153 = vcmask 179352
        %154 = vst.msk [vmem:[%s136 + $0x3] sm:$0xff] %vm153, 0.0
        %155 = vst.msk [vmem:[%s136 + $0xb] sm:$0xff] %vm153, 0.0
        %vm156 = vcmask 174080
        %157 = vst.msk [vmem:[%s136] sm:$0x7] %vm156, 0.0
        %158 = vst.msk [vmem:[%s136 + $0x13] sm:$0x7] %vm156, 0.0
        %p159 = scmp.lt.s32.totalorder %s15, 7
        %s160 = scalar_select %p159, %s15, 7
        %s161 = smul.addr %s160, 3
        %s162 = smul.addr %s161, 8
        %s163 = scalar_lea.vmem %s1, %s162
        // Predicated region
        $region29: #{tpu_custom_call.1} parent=23 // pred_check
          %p164 = pneg %p59
        $region30: #{tpu_custom_call.1} parent=23 // pred_check_branch
          %166 = sbr.rel (%p164) target = $region32
        $region31: #{tpu_custom_call.1} parent=23 // pred_region
          _
        $region32: #{tpu_custom_call.1} parent=23 // pred_fallthru
          _
      $region24: #{tpu_custom_call.1} parent=5 // pred_fallthru
        _
      %p167 = scmp.le.s32.totalorder 2, %s10
      // Predicated region
      $region33: #{tpu_custom_call.1} parent=5 // pred_check
        %p168 = pneg %p167
      $region34: #{tpu_custom_call.1} parent=5 // pred_check_branch
        %170 = sbr.rel (%p168) target = $region36
      $region35: #{tpu_custom_call.1} parent=5 // pred_region
        %s171 = ssub.s32 %s10, 2
        // Predicated region
        $region37: #{tpu_custom_call.1} parent=35 // pred_check
          %p172 = pneg %p65
        $region38: #{tpu_custom_call.1} parent=35 // pred_check_branch
          %174 = sbr.rel (%p172) target = $region40
        $region39: #{tpu_custom_call.1} parent=35 // pred_region
          %p175 = scmp.lt.s32.totalorder %s16, 7
          %s176 = scalar_select %p175, %s16, 7
          %s177 = smul.addr %s176, 3
          %s178 = smul.addr %s177, 8
          %s179 = scalar_lea.vmem %s1, %s178
        $region40: #{tpu_custom_call.1} parent=35 // pred_fallthru
          _
      $region36: #{tpu_custom_call.1} parent=5 // pred_fallthru
        _
    $region6: #{tpu_custom_call.1} parent=1 // loop_footer
      %s14 = sadd.s32 1, %s10
    $region7: #{tpu_custom_call.1} parent=1 // loop_footer_branch
      %9 = sbr.rel target = $region3
    $region8: #{tpu_custom_call.1} parent=1 // loop_exit
      _
    %180 = vsyncpa [#allocation3], 1
    %s181 = scalar_lea.sflag [#allocation3], 1
    %182 = vsyncpa %s181, 1

</llo_original>
